<compile_context>
chip_gen: v5e
topology: v5e:2x2
jax: 0.10.0
libtpu: 0.0.40
codegen_flags: <defaults>
</compile_context>

<pallas_src>
import functools

import jax
import jax.numpy as jnp
from jax.experimental import pallas as pl
from jax.experimental.pallas import tpu as pltpu


def _se_kernel(x_ref, w1_ref, b1_ref, w2_ref, b2_ref, o_ref, *, inv_hw):
    # x_ref/o_ref: (Bt, C, HW)   w1_ref: (C, Cr)  b1_ref: (1, Cr)
    # w2_ref: (Cr, C)            b2_ref: (1, C)
    x = x_ref[...]                                              # keep input dtype

    # AdaptiveAvgPool2d(1): dtype-accumulating sum (no f32 block temporary),
    # divided by the true H*W.
    y = jnp.sum(x, axis=-1, dtype=jnp.float32) * inv_hw         # (Bt, C)

    # fc1 + ReLU (tiny matmul, fully hidden under the x DMA).
    h = jnp.dot(y, w1_ref[...], preferred_element_type=jnp.float32) + b1_ref[...]
    h = jnp.maximum(h, 0.0)                                     # (Bt, Cr)

    # fc2 + clamp(0, 1).
    s = jnp.dot(h, w2_ref[...], preferred_element_type=jnp.float32) + b2_ref[...]
    s = jnp.clip(s, 0.0, 1.0)                                   # (Bt, C)

    # Single broadcast of the scale; multiply + store in the input dtype so the
    # dominant streaming pass is one VALU op per vreg.
    s_b = s.astype(o_ref.dtype)[:, :, None]                     # (Bt, C, 1)
    o_ref[...] = x * s_b


def _vmem_budgets():
    """Generation-aware (block_budget_bytes, vmem_limit_cap_bytes)."""
    try:
        physical = int(pltpu.get_tpu_info().vmem_capacity_bytes)
    except Exception:
        physical = 64 << 20          # be conservative (v7x has the least VMEM)
    if physical >= (128 << 20):      # v5e / v6e: 128 MiB physical VMEM
        return 12 << 20, 96 << 20
    return 6 << 20, 48 << 20         # v7x: 64 MiB physical VMEM


def _pick_batch_tile(B, per_img_bytes, budget_bytes, *,
                     min_block_bytes=1 << 20, target_steps=8):
    """Pick Bt (a divisor of B) such that:
      - the (Bt, C, HW) block fits the VMEM streaming budget,
      - blocks stay >= ~1 MiB where possible (amortize ~0.35us/step overhead),
      - the grid-step count is even (v7x megacore balance) and close to
        `target_steps` so the double-buffered DMA pipeline reaches steady state.
    Among equally-good candidates prefer the larger block."""
    divisors = [d for d in range(1, B + 1) if B % d == 0]
    fitting = [d for d in divisors if d * per_img_bytes <= budget_bytes]
    if not fitting:
        return 1                      # single image already over budget; caller checks
    biggest = max(fitting)

    def key(d):
        steps = B // d
        block = d * per_img_bytes
        return (
            block >= min_block_bytes or d == biggest,   # don't shrink below ~1 MiB
            steps % 2 == 0 or steps == 1,               # even split across 2 TCs
            -abs(steps - target_steps),                 # near target pipeline depth
            block,                                      # then: fewest, biggest blocks
        )

    return max(fitting, key=key)


def se_layer(x, w1, b1, w2, b2):
    """x: (B, C, H, W). w1: (Cr, C) torch-style, b1: (Cr,), w2: (C, Cr), b2: (C,)."""
    B, C, H, W = x.shape
    Cr = w1.shape[0]
    HW = H * W
    itemsize = jnp.dtype(x.dtype).itemsize

    # No padding / slicing: stream the true (B, C, HW) layout.
    x_flat = x.reshape(B, C, HW)

    block_budget, limit_cap = _vmem_budgets()
    per_img_bytes = C * HW * itemsize
    Bt = _pick_batch_tile(B, per_img_bytes, block_budget)
    n_steps = B // Bt

    # PyTorch Linear computes y = x @ W.T + b; pre-transpose weights once.
    w1_t = jnp.transpose(w1).astype(jnp.float32)     # (C, Cr)
    w2_t = jnp.transpose(w2).astype(jnp.float32)     # (Cr, C)
    b1_2d = b1.reshape(1, Cr).astype(jnp.float32)
    b2_2d = b2.reshape(1, C).astype(jnp.float32)

    # VMEM bookkeeping: double-buffered in+out blocks, (double-buffered) weights,
    # in-kernel temporaries (pooled vector, FC activations, scale), plus slack.
    block_bytes = Bt * per_img_bytes
    weight_bytes = (C * Cr + Cr * C + Cr + C) * 4
    temps_bytes = 4 * Bt * max(C, Cr) * 4 + Bt * C * itemsize
    vmem_need = 4 * block_bytes + 2 * weight_bytes + temps_bytes + (2 << 20)
    if vmem_need > limit_cap:
        # TODO(synk): add a two-pass HW-chunked fallback (pool pass + multiply
        # pass) for feature maps too large to double-buffer in VMEM.
        raise ValueError(
            f"SELayer block ({block_bytes} B) needs ~{vmem_need} B of VMEM, "
            f"exceeding the {limit_cap} B cap for this TPU generation."
        )
    vmem_limit = int(min(max(vmem_need, 16 << 20), limit_cap))

    kernel = functools.partial(_se_kernel, inv_hw=1.0 / HW)

    out_flat = pl.pallas_call(
        kernel,
        out_shape=jax.ShapeDtypeStruct((B, C, HW), x.dtype),
        grid_spec=pltpu.PrefetchScalarGridSpec(
            num_scalar_prefetch=0,
            grid=(n_steps,),
            in_specs=[
                pl.BlockSpec((Bt, C, HW), lambda i: (i, 0, 0)),
                pl.BlockSpec((C, Cr), lambda i: (0, 0)),
                pl.BlockSpec((1, Cr), lambda i: (0, 0)),
                pl.BlockSpec((Cr, C), lambda i: (0, 0)),
                pl.BlockSpec((1, C), lambda i: (0, 0)),
            ],
            out_specs=pl.BlockSpec((Bt, C, HW), lambda i: (i, 0, 0)),
        ),
        compiler_params=pltpu.CompilerParams(
            dimension_semantics=("parallel",),
            vmem_limit_bytes=vmem_limit,
        ),
        cost_estimate=pl.CostEstimate(
            flops=2 * B * C * HW + 4 * B * C * Cr,
            transcendentals=0,
            bytes_accessed=2 * B * C * HW * itemsize + weight_bytes,
        ),
    )(x_flat, w1_t, b1_2d, w2_t, b2_2d)

    return out_flat.reshape(B, C, H, W)


def se_layer_ref(x, w1, b1, w2, b2):
    """Pure-JAX reference mirroring the PyTorch forward."""
    y = jnp.mean(x, axis=(2, 3))                       # (B, C)
    y = jnp.maximum(y @ w1.T + b1, 0.0)                # (B, Cr)
    y = y @ w2.T + b2                                  # (B, C)
    y = jnp.clip(y, 0.0, 1.0)
    return x * y[:, :, None, None]


if __name__ == "__main__":
    B, C, H, W = 2, 4, 16, 16
    reduction = 4
    Cr = C // reduction

    key = jax.random.PRNGKey(0)
    kx, kw1, kb1, kw2, kb2 = jax.random.split(key, 5)

    x = jax.random.normal(kx, (B, C, H, W), dtype=jnp.float32)
    # Shapes match nn.Linear(channel, channel // 4), nn.Linear(channel // 4, channel).
    w1 = jax.random.normal(kw1, (Cr, C), dtype=jnp.float32) * 0.5
    b1 = jax.random.normal(kb1, (Cr,), dtype=jnp.float32) * 0.1
    w2 = jax.random.normal(kw2, (C, Cr), dtype=jnp.float32) * 0.5
    b2 = jax.random.normal(kb2, (C,), dtype=jnp.float32) * 0.1

    out = se_layer(x, w1, b1, w2, b2)
    out = jax.block_until_ready(out)

    ref = se_layer_ref(x, w1, b1, w2, b2)
    assert out.shape == (B, C, H, W)
    assert jnp.allclose(out, ref, atol=1e-5, rtol=1e-5), "mismatch vs reference"

    print("KERNEL_OK")
</pallas_src>

<mosaic_0001>
module attributes {stable_mosaic.version = 11 : i64} {
  func.func @_se_kernel(%arg0: i32, %arg1: memref<2x4x256xf32, #tpu.memory_space<vmem>>, %arg2: memref<4x1xf32, #tpu.memory_space<vmem>>, %arg3: memref<1x1xf32, #tpu.memory_space<vmem>>, %arg4: memref<1x4xf32, #tpu.memory_space<vmem>>, %arg5: memref<1x4xf32, #tpu.memory_space<vmem>>, %arg6: memref<2x4x256xf32, #tpu.memory_space<vmem>>) attributes {dimension_semantics = [#tpu.dimension_semantics<parallel>], iteration_bounds = array<i64: 1>, scalar_prefetch = 0 : i64, scratch_operands = 0 : i64, tpu.core_type = #tpu.core_type<tc>, window_params = [{transform_indices = @transform_0, window_bounds = array<i64: 2, 4, 256>}, {pipeline_mode = #tpu.pipeline_mode<synchronous>, transform_indices = @transform_1, window_bounds = array<i64: 4, 1>}, {pipeline_mode = #tpu.pipeline_mode<synchronous>, transform_indices = @transform_2, window_bounds = array<i64: 1, 1>}, {pipeline_mode = #tpu.pipeline_mode<synchronous>, transform_indices = @transform_3, window_bounds = array<i64: 1, 4>}, {pipeline_mode = #tpu.pipeline_mode<synchronous>, transform_indices = @transform_4, window_bounds = array<i64: 1, 4>}, {transform_indices = @transform_5, window_bounds = array<i64: 2, 4, 256>}]} {
    %c0 = arith.constant 0 : index
    %c0_0 = arith.constant 0 : index
    %c0_1 = arith.constant 0 : index
    %0 = vector.load %arg1[%c0, %c0_0, %c0_1] : memref<2x4x256xf32, #tpu.memory_space<vmem>>, vector<2x4x256xf32>
    %cst = arith.constant dense<0.000000e+00> : vector<2x4xf32>
    %1 = vector.multi_reduction <add>, %0, %cst [2] : vector<2x4x256xf32> to vector<2x4xf32>
    %cst_2 = arith.constant 3.906250e-03 : f32
    %2 = vector.broadcast %cst_2 : f32 to vector<2x4xf32>
    %3 = arith.mulf %1, %2 : vector<2x4xf32>
    %c0_3 = arith.constant 0 : index
    %c0_4 = arith.constant 0 : index
    %4 = vector.load %arg2[%c0_3, %c0_4] : memref<4x1xf32, #tpu.memory_space<vmem>>, vector<4x1xf32>
    %cst_5 = arith.constant dense<0.000000e+00> : vector<2x1xf32>
    %5 = tpu.matmul %3, %4, %cst_5 {dimension_numbers = #tpu.dot_dimension_numbers<[1], [0], [0], [1], [0, 0, 1, 1], [], []>} : vector<2x4xf32>, vector<4x1xf32>, vector<2x1xf32> -> vector<2x1xf32>
    %c0_6 = arith.constant 0 : index
    %c0_7 = arith.constant 0 : index
    %6 = vector.load %arg3[%c0_6, %c0_7] : memref<1x1xf32, #tpu.memory_space<vmem>>, vector<1x1xf32>
    %7 = vector.broadcast %6 : vector<1x1xf32> to vector<2x1xf32>
    %8 = arith.addf %5, %7 : vector<2x1xf32>
    %cst_8 = arith.constant 0.000000e+00 : f32
    %9 = vector.broadcast %cst_8 : f32 to vector<2x1xf32>
    %10 = arith.maximumf %8, %9 : vector<2x1xf32>
    %c0_9 = arith.constant 0 : index
    %c0_10 = arith.constant 0 : index
    %11 = vector.load %arg4[%c0_9, %c0_10] : memref<1x4xf32, #tpu.memory_space<vmem>>, vector<1x4xf32>
    %cst_11 = arith.constant dense<0.000000e+00> : vector<2x4xf32>
    %12 = tpu.matmul %10, %11, %cst_11 {dimension_numbers = #tpu.dot_dimension_numbers<[1], [0], [0], [1], [0, 0, 1, 1], [], []>} : vector<2x1xf32>, vector<1x4xf32>, vector<2x4xf32> -> vector<2x4xf32>
    %c0_12 = arith.constant 0 : index
    %c0_13 = arith.constant 0 : index
    %13 = vector.load %arg5[%c0_12, %c0_13] : memref<1x4xf32, #tpu.memory_space<vmem>>, vector<1x4xf32>
    %14 = vector.broadcast %13 : vector<1x4xf32> to vector<2x4xf32>
    %15 = arith.addf %12, %14 : vector<2x4xf32>
    %cst_14 = arith.constant 0.000000e+00 : f32
    %cst_15 = arith.constant 1.000000e+00 : f32
    %16 = vector.broadcast %cst_14 : f32 to vector<2x4xf32>
    %17 = arith.maximumf %16, %15 : vector<2x4xf32>
    %18 = vector.broadcast %cst_15 : f32 to vector<2x4xf32>
    %19 = arith.minimumf %18, %17 : vector<2x4xf32>
    %20 = vector.shape_cast %19 : vector<2x4xf32> to vector<2x4x1xf32>
    %21 = vector.broadcast %20 : vector<2x4x1xf32> to vector<2x4x256xf32>
    %22 = arith.mulf %0, %21 : vector<2x4x256xf32>
    %c0_16 = arith.constant 0 : index
    %c0_17 = arith.constant 0 : index
    %c0_18 = arith.constant 0 : index
    %23 = vector.load %arg6[%c0_16, %c0_17, %c0_18] : memref<2x4x256xf32, #tpu.memory_space<vmem>>, vector<2x4x256xf32>
    tpu.vector_store %arg6[%c0_16, %c0_17, %c0_18], %22 {strides = array<i32>} : memref<2x4x256xf32, #tpu.memory_space<vmem>>, vector<2x4x256xf32>,
    return
  }
  func.func @transform_0(%arg0: i32) -> (i32, i32, i32) {
    %c0_i32 = arith.constant 0 : i32
    %c0_i32_0 = arith.constant 0 : i32
    %c0_i32_1 = arith.constant 0 : i32
    return %arg0, %c0_i32, %c0_i32_0 : i32, i32, i32
  }
  func.func @transform_1(%arg0: i32) -> (i32, i32) {
    %c0_i32 = arith.constant 0 : i32
    %c0_i32_0 = arith.constant 0 : i32
    %c0_i32_1 = arith.constant 0 : i32
    return %c0_i32, %c0_i32_0 : i32, i32
  }
  func.func @transform_2(%arg0: i32) -> (i32, i32) {
    %c0_i32 = arith.constant 0 : i32
    %c0_i32_0 = arith.constant 0 : i32
    %c0_i32_1 = arith.constant 0 : i32
    return %c0_i32, %c0_i32_0 : i32, i32
  }
  func.func @transform_3(%arg0: i32) -> (i32, i32) {
    %c0_i32 = arith.constant 0 : i32
    %c0_i32_0 = arith.constant 0 : i32
    %c0_i32_1 = arith.constant 0 : i32
    return %c0_i32, %c0_i32_0 : i32, i32
  }
  func.func @transform_4(%arg0: i32) -> (i32, i32) {
    %c0_i32 = arith.constant 0 : i32
    %c0_i32_0 = arith.constant 0 : i32
    %c0_i32_1 = arith.constant 0 : i32
    return %c0_i32, %c0_i32_0 : i32, i32
  }
  func.func @transform_5(%arg0: i32) -> (i32, i32, i32) {
    %c0_i32 = arith.constant 0 : i32
    %c0_i32_0 = arith.constant 0 : i32
    %c0_i32_1 = arith.constant 0 : i32
    return %arg0, %c0_i32, %c0_i32_0 : i32, i32, i32
  }
}

</mosaic_0001>

<llo_original>
// kernel: tpu_custom_call.1
$region0: #{tpu_custom_call.1}
  #allocation0 [shape = 'u32[]', space=smem, size = 0x4, offset = 0x4, fixed_abs, tag = 'smem constant byte address 0x4 - core index']
  #allocation1 [shape = 'u32[72,128]{1,0:T(1,128)}', space=vmem, size = 0x9000, scoped, tag = 'internal scratch']
  #allocation2 [shape = 'f32[1,1]{1,0:T(1,128)S(1)}', space=vmem, size = 0x200, scoped, tag = 'scoped memory for tpu_custom_call.1']
  %s0 = inlined_call_operand.hbm [shape: f32[2,4,256], index: 0, kind: input, shape index: {}]
  %s1 = inlined_call_operand.vmem [shape: f32[4,1], index: 1, kind: input, shape index: {}]
  %s2 = inlined_call_operand.<no memory space> [shape: f32[1,1], index: 2, kind: input, shape index: {}]
  %s3 = inlined_call_operand.vmem [shape: f32[1,4], index: 3, kind: input, shape index: {}]
  %s4 = inlined_call_operand.vmem [shape: f32[1,4], index: 4, kind: input, shape index: {}]
  %s5 = inlined_call_operand.hbm [shape: f32[2,4,256], index: 5, kind: output, shape index: {}]
  %s6 = sld [smem:[#allocation0]]
  $region34: #{tpu_custom_call.1} parent=0
    _
  %s8 = ssub.s32 1, %s6
  %s9 = scalar_select 0, %s8, %s6
  %v10 = vstv %s2
  %11 = vst [vmem:[#allocation2] sm:$0x1] %v10
  $region1: #{tpu_custom_call.1} parent=0
    #allocation3 [shape = 'u8[8192]{0}', space=vmem, size = 0x2000, scoped, tag = 'input window, operand 0, single buffered']
    #allocation4 [shape = 's32[1]{0}', space=sflag, size = 0x4, scoped, tag = 'scoped memory for tpu_custom_call.1']
    #allocation5 [shape = 's32[1]{0}', space=sflag, size = 0x4, scoped, tag = 'scoped memory for tpu_custom_call.1']
    #allocation6 [shape = 'u8[8192]{0}', space=vmem, size = 0x2000, scoped, tag = 'output window, operand 0, single buffered']
    %12 = vsyncpa [#allocation4], 0
    %13 = vsyncpa [#allocation5], 0
    // Predicated region
    $region2: #{tpu_custom_call.1} parent=1 // pred_check
      _
    $region3: #{tpu_custom_call.1} parent=1 // pred_check_branch
      %15 = sbr.rel (0) target = $region5
    $region4: #{tpu_custom_call.1} parent=1 // pred_region
      %17 = vsyncadd [#allocation4], 0
      %s18 = sshll.u32 %s0, 4
      %s19 = int_to_ptr.hbm [resolvable:$true] %s18
      %s20 = sshll.u32 [#allocation3], 4
      %s21 = int_to_ptr.vmem [resolvable:$true] %s20
      %26 = dma.hbm_to_vmem [thread:$0]  %s19, 256, %s21, [#allocation4], 128, 128, 8
    $region5: #{tpu_custom_call.1} parent=1 // pred_fallthru
      _
    // Predicated region
    $region6: #{tpu_custom_call.1} parent=1 // pred_check
      _
    $region7: #{tpu_custom_call.1} parent=1 // pred_check_branch
      %28 = sbr.rel (0) target = $region9
    $region8: #{tpu_custom_call.1} parent=1 // pred_region
      _
    $region9: #{tpu_custom_call.1} parent=1 // pred_fallthru
      _
    // Predicated region
    $region10: #{tpu_custom_call.1} parent=1 // pred_check
      _
    $region11: #{tpu_custom_call.1} parent=1 // pred_check_branch
      %30 = sbr.rel (0) target = $region13
    $region12: #{tpu_custom_call.1} parent=1 // pred_region
      _
    $region13: #{tpu_custom_call.1} parent=1 // pred_fallthru
      _
    // Predicated region
    $region14: #{tpu_custom_call.1} parent=1 // pred_check
      _
    $region15: #{tpu_custom_call.1} parent=1 // pred_check_branch
      %32 = sbr.rel (0) target = $region17
    $region16: #{tpu_custom_call.1} parent=1 // pred_region
      _
    $region17: #{tpu_custom_call.1} parent=1 // pred_fallthru
      _
    // Predicated region
    $region18: #{tpu_custom_call.1} parent=1 // pred_check
      _
    $region19: #{tpu_custom_call.1} parent=1 // pred_check_branch
      %34 = sbr.rel (0) target = $region21
    $region20: #{tpu_custom_call.1} parent=1 // pred_region
      _
    $region21: #{tpu_custom_call.1} parent=1 // pred_fallthru
      _
    // Predicated region
    $region22: #{tpu_custom_call.1} parent=1 // pred_check
      _
    $region23: #{tpu_custom_call.1} parent=1 // pred_check_branch
      %36 = sbr.rel (0) target = $region25
    $region24: #{tpu_custom_call.1} parent=1 // pred_region
      %38 = dma.done [#allocation4], 256
    $region25: #{tpu_custom_call.1} parent=1 // pred_fallthru
      _
    %v39 = vld [vmem:[#allocation3] sm:$0xff]
    %v40 = vld [vmem:[#allocation3 + $0x8] sm:$0xff]
    %43 = vst [vmem:[#allocation1] ss:$2 sm:$0xff] %v39
    %v44 = vld.sshfl [vmem:[#allocation1] sm:$0xff pattern:$0x75316420]
    %v45 = vld.sshfl [vmem:[#allocation1 + $0x8] sm:$0xff pattern:$0x75316420]
    %s46 = scalar_lea.vmem [#allocation1], 16
    %47 = vst [vmem:[%s46] ss:$2 sm:$0xff] %v40
    %v48 = vld.sshfl [vmem:[#allocation1 + $0x10] sm:$0xff pattern:$0x75316420]
    %v49 = vld.sshfl [vmem:[#allocation1 + $0x18] sm:$0xff pattern:$0x75316420]
    %vm54 = vcmask 1043456
    %v55 = vsel %vm54, %v44, 0.0
    %v56 = vsel %vm54, %v45, 0.0
    %v57 = vadd.f32 %v55, %v56
    %58 = vadd.xlane.f32.xlu0 %v57
    %v59 = vpop.xlane.xlu0 %58
    %v60 = vsel %vm54, %v48, 0.0
    %v61 = vsel %vm54, %v49, 0.0
    %v62 = vadd.f32 %v60, %v61
    %63 = vadd.xlane.f32.xlu0 %v62
    %v64 = vpop.xlane.xlu0 %63
    %v65 = vmul.f32 %v59, 0.00390625
    %v66 = vmul.f32 %v64, 0.00390625
    %v67 = vld [vmem:[%s1] sm:$0xf]
    %v68 = vld [vmem:[#allocation2] sm:$0x1]
    %v70 = vperm.slane %v68, 0
    %v74 = vlaneseq
    %v75 = vand.u32 %v74, 127
    %v76 = vperm.slane %v65, %v75
    %v77 = vperm.slane %v66, %v75
    %vm78 = vcmask 1041409
    %v79 = vsel %vm78, %v77, %v76
    %vm80 = vcmask 31744
    %v81 = vsel %vm80, %v79, 0
    %v84 = vsel %vm54, %v67, 0
    %86 = vmatpush.msra.mxu0 0.0
    %87 = vmatpush.msra.mxu0 0.0
    %88 = vmatpush.msra.mxu0 0.0
    %89 = vmatpush.msra.mxu0 0.0
    %90 = vmatpush.msra.mxu0 0.0
    %91 = vmatpush.msra.mxu0 0.0
    %92 = vmatpush.msra.mxu0 0.0
    %93 = vmatpush.msra.mxu0 0.0
    %94 = vmatpush.msra.mxu0 0.0
    %95 = vmatpush.msra.mxu0 0.0
    %96 = vmatpush.msra.mxu0 0.0
    %97 = vmatpush.msra.mxu0 0.0
    %98 = vmatpush.msra.mxu0 0.0
    %99 = vmatpush.msra.mxu0 0.0
    %100 = vmatpush.msra.mxu0 0.0
    %101 = vmatpush.msra.mxu0 %v84
    %102 = vmatmul.f32.gmra.mxu0 %v81
    %v103 = vpop.f32.mrf.mxu0
    %v104 = vadd.f32 %v70, %v103
    %105 = vdwg.mxu0
    %v106 = vmax.f32 %v104, 0.0
    %v107 = vld [vmem:[%s3] sm:$0x1]
    %v108 = vld [vmem:[%s4] sm:$0x1]
    %v110 = vperm.slane %v108, 0
    %vm112 = vcmask 7168
    %v114 = vsel %vm112, %v106, 0
    %vm116 = vcmask 1040384
    %v118 = vsel %vm116, %v107, 0
    %120 = vmatpush.msra.mxu0 0.0
    %121 = vmatpush.msra.mxu0 0.0
    %122 = vmatpush.msra.mxu0 0.0
    %123 = vmatpush.msra.mxu0 0.0
    %124 = vmatpush.msra.mxu0 0.0
    %125 = vmatpush.msra.mxu0 0.0
    %126 = vmatpush.msra.mxu0 0.0
    %127 = vmatpush.msra.mxu0 0.0
    %128 = vmatpush.msra.mxu0 0.0
    %129 = vmatpush.msra.mxu0 0.0
    %130 = vmatpush.msra.mxu0 0.0
    %131 = vmatpush.msra.mxu0 0.0
    %132 = vmatpush.msra.mxu0 0.0
    %133 = vmatpush.msra.mxu0 0.0
    %134 = vmatpush.msra.mxu0 0.0
    %135 = vmatpush.msra.mxu0 %v118
    %136 = vmatmul.f32.gmra.mxu0 %v114
    %v137 = vpop.f32.mrf.mxu0
    %v138 = vadd.f32 %v110, %v137
    %139 = vdwg.mxu0
    %v140 = vmax.f32 %v138, 0.0
    %v141 = vmin.f32 %v140, 1.0
    %v142 = vperm.slane %v141, 0
    %v143 = vlaneseq
    %v144 = vshrl.u32 %v143, 7
    %146 = vset.pattern.permute.xlu0 %v144
    %147 = vperm.xlu0 %146, %v142
    %v148 = vpop.permute.xlu0 %147
    %v149 = vperm.slane %v141, 1
    %v150 = vlaneseq
    %v151 = vshrl.u32 %v150, 7
    %153 = vset.pattern.permute.xlu0 %v151
    %154 = vperm.xlu0 %153, %v149
    %v155 = vpop.permute.xlu0 %154
    %v159 = vunpack.c.l.s4 839922192
    %v160 = vunpack.c.0.s8 %v159
    %v161 = vperm.slane %v148, %v160
    %v163 = vunpack.c.l.s4 839922192
    %v164 = vunpack.c.0.s8 %v163
    %v165 = vperm.slane %v155, %v164
    %v168 = vmul.f32 %v39, %v161
    %v169 = vmul.f32 %v40, %v165
    %170 = vst [vmem:[#allocation6] sm:$0xff] %v168
    %171 = vst [vmem:[#allocation6 + $0x8] sm:$0xff] %v169
    // Predicated region
    $region26: #{tpu_custom_call.1} parent=1 // pred_check
      _
    $region27: #{tpu_custom_call.1} parent=1 // pred_check_branch
      %173 = sbr.rel (0) target = $region29
    $region28: #{tpu_custom_call.1} parent=1 // pred_region
      %175 = vsyncadd [#allocation5], 0
      %s176 = sshll.u32 [#allocation6], 4
      %s177 = int_to_ptr.vmem [resolvable:$true] %s176
      %s178 = sshll.u32 %s5, 4
      %s179 = int_to_ptr.hbm [resolvable:$true] %s178
      %184 = dma.vmem_to_hbm [thread:$0]  %s177, 256, %s179, [#allocation5], 128, 128, 8
    $region29: #{tpu_custom_call.1} parent=1 // pred_fallthru
      _
    // Predicated region
    $region30: #{tpu_custom_call.1} parent=1 // pred_check
      _
    $region31: #{tpu_custom_call.1} parent=1 // pred_check_branch
      %186 = sbr.rel (0) target = $region33
    $region32: #{tpu_custom_call.1} parent=1 // pred_region
      %188 = dma.done [#allocation5], 256
    $region33: #{tpu_custom_call.1} parent=1 // pred_fallthru
      _
    %189 = vsyncpa [#allocation4], 1
    %190 = vsyncpa [#allocation5], 1

</llo_original>
